<compile_context>
chip_gen: v6e
topology: v6e:2x2x1
jax: 0.10.0
libtpu: 0.0.40
codegen_flags: <defaults>
</compile_context>

<pallas_src>
import math

import jax
import jax.numpy as jnp
from jax.experimental import pallas as pl
from jax.experimental.pallas import tpu as pltpu


def _round_up(v, m):
    return (v + m - 1) // m * m


def _sinusoidal_kernel(x_ref, freq_ref, phase_ref, out_ref):
    # x_ref:     (TILE_R, 1)  when p == 1, or (TILE_R, W) lane-packed when p > 1
    # freq_ref:  (1, W)  duplicated frequency table [f | f] (tiled p times)
    # phase_ref: (1, W)  [0..0 | pi/2..pi/2] (tiled p times)
    # out_ref:   (TILE_R, W)
    # Single full-width store: sin(e) on the first half, sin(e + pi/2) = cos(e)
    # on the second half.  One broadcast multiply + one add + one sin + one vst.
    emb = x_ref[...] * freq_ref[...] + phase_ref[...]
    out_ref[...] = jnp.sin(emb).astype(out_ref.dtype)


def sinusoidal_pos_emb(x, dim, *, out_dtype=jnp.float32):
    """Pallas-TPU equivalent of SinusoidalPosEmb(dim)(x).

    Args:
      x:         (B,) array of timesteps (any real/int dtype).
      dim:       embedding dimension (even, >= 4).
      out_dtype: output dtype (float32 matches PyTorch; bf16 halves writeback).
    Returns:
      (B, dim) embedding: [sin(x*f) | cos(x*f)].
    """
    assert x.ndim == 1, "x must be a 1-D batch of scalar timesteps"
    assert dim % 2 == 0 and dim >= 4, "dim must be even and >= 4"
    B = x.shape[0]
    half_dim = dim // 2
    scale = math.log(10000.0) / (half_dim - 1)

    # Hoisted constant tables (computed once, resident across the grid).
    freqs = jnp.exp(jnp.arange(half_dim, dtype=jnp.float32) * jnp.float32(-scale))
    freqs_full = jnp.concatenate([freqs, freqs])                       # (dim,)
    phase = jnp.concatenate(
        [jnp.zeros((half_dim,), jnp.float32),
         jnp.full((half_dim,), jnp.float32(math.pi / 2.0))])           # (dim,)

    # Lane-dense packing factor: p timesteps per output row when dim < 128.
    p = 128 // dim if (dim < 128 and 128 % dim == 0) else 1
    W = p * dim

    freq_row = jnp.tile(freqs_full, p).reshape(1, W)
    phase_row = jnp.tile(phase, p).reshape(1, W)

    out_itemsize = jnp.dtype(out_dtype).itemsize
    n_rows = pl.cdiv(B, p)                 # packed rows of p timesteps
    rows_aligned = _round_up(n_rows, 8)    # sublane granularity

    # Tile rows: largest tile under a ~6 MiB (x + out) per-buffer budget, capped
    # at 1024 rows; when there is enough work, force >= 2 grid steps so the
    # "parallel" axis can be split across both v7x TensorCores.
    x_cols = W if p > 1 else 1
    bytes_per_row = (_round_up(x_cols, 128) * 4
                     + _round_up(W, 128) * out_itemsize)
    budget_rows = max(8, ((6 << 20) // bytes_per_row) // 8 * 8)
    tile_rows = min(rows_aligned, budget_rows, 1024)
    if rows_aligned >= 16:
        tile_rows = min(tile_rows, _round_up(pl.cdiv(rows_aligned, 2), 8))
    tile_rows = max(8, tile_rows)

    num_tiles = pl.cdiv(n_rows, tile_rows)
    rows_pad = num_tiles * tile_rows
    b_pad = rows_pad * p

    # TODO(synk): the zero-pad of x is an extra (tiny, B-scalar) HBM copy; it
    # could be folded into a ragged last tile, but it is noise at these sizes.
    x_flat = x.astype(jnp.float32)
    if b_pad != B:
        x_flat = jnp.pad(x_flat, (0, b_pad - B))
    if p > 1:
        # Lane-packed layout: row r, lanes [j*dim:(j+1)*dim] hold timestep r*p+j.
        # Wrapper-side layout plumbing only; exact f32, no in-kernel relayout.
        x2d = jnp.repeat(x_flat.reshape(rows_pad, p), dim, axis=1)     # (rows, W)
    else:
        x2d = x_flat.reshape(rows_pad, 1)

    # VMEM footprint from (8, 128)-padded block sizes, double-buffered.
    def _tile_bytes(r, c, itemsize):
        return _round_up(max(r, 1), 8) * _round_up(max(c, 1), 128) * itemsize

    need = (2 * (_tile_bytes(tile_rows, x_cols, 4)
                 + _tile_bytes(tile_rows, W, out_itemsize))
            + 2 * 2 * _tile_bytes(1, W, 4))
    vmem_limit = int(min(32 << 20, max(8 << 20, need + (8 << 20))))

    out = pl.pallas_call(
        _sinusoidal_kernel,
        out_shape=jax.ShapeDtypeStruct((rows_pad, W), out_dtype),
        grid_spec=pltpu.PrefetchScalarGridSpec(
            num_scalar_prefetch=0,
            grid=(num_tiles,),
            in_specs=[
                pl.BlockSpec((tile_rows, x_cols), lambda i: (i, 0)),
                pl.BlockSpec((1, W), lambda i: (0, 0)),
                pl.BlockSpec((1, W), lambda i: (0, 0)),
            ],
            out_specs=pl.BlockSpec((tile_rows, W), lambda i: (i, 0)),
        ),
        compiler_params=pltpu.CompilerParams(
            dimension_semantics=("parallel",),   # sharded across TCs on v7x
            vmem_limit_bytes=vmem_limit,
        ),
    )(x2d, freq_row, phase_row)

    # Free (row-major) un-pack: (rows, p*dim) -> (rows*p, dim), then drop pad.
    out = out.reshape(rows_pad * p, dim)
    if b_pad != B:
        out = out[:B]
    return out


def _reference(x, dim):
    half_dim = dim // 2
    s = math.log(10000.0) / (half_dim - 1)
    freqs = jnp.exp(jnp.arange(half_dim, dtype=jnp.float32) * -s)
    emb = x[:, None].astype(jnp.float32) * freqs[None, :]
    return jnp.concatenate([jnp.sin(emb), jnp.cos(emb)], axis=-1)


if __name__ == "__main__":
    key = jax.random.PRNGKey(0)
    k1, k2 = jax.random.split(key)

    # Config A: dim < 128 -> lane-packed path (4 timesteps per 128-lane row).
    # Moderate timesteps -> tight tolerance is meaningful (sin/cos of huge
    # angles is inherently ill-conditioned in f32).
    B1, d1 = 8, 32
    x1 = jax.random.uniform(k1, (B1,), jnp.float32, minval=0.0, maxval=16.0)
    o1 = jax.block_until_ready(sinusoidal_pos_emb(x1, d1))
    r1 = _reference(x1, d1)
    assert o1.shape == (B1, d1)
    assert jnp.allclose(o1, r1, atol=1e-5, rtol=0.0), "config A mismatch"

    # Config B: dim >= 128 -> simple path, 2 grid tiles, realistic DDPM integer
    # timesteps 0..999.  Looser tolerance: the pi/2 phase fold used for the
    # fused single store rounds angles of O(1e3) by ~ulp(1e3) ~ 6e-5, and
    # sin/cos at such arguments are ill-conditioned (irrelevant for training).
    B2, d2 = 12, 256
    x2 = jnp.floor(jax.random.uniform(k2, (B2,), jnp.float32,
                                      minval=0.0, maxval=1000.0))
    o2 = jax.block_until_ready(sinusoidal_pos_emb(x2, d2))
    r2 = _reference(x2, d2)
    assert o2.shape == (B2, d2)
    assert jnp.allclose(o2, r2, atol=2e-3, rtol=0.0), "config B mismatch"

    print("KERNEL_OK")
</pallas_src>

<mosaic_0001>
module attributes {stable_mosaic.version = 11 : i64} {
  func.func @_sinusoidal_kernel(%arg0: i32, %arg1: memref<8x128xf32, #tpu.memory_space<vmem>>, %arg2: memref<1x128xf32, #tpu.memory_space<vmem>>, %arg3: memref<1x128xf32, #tpu.memory_space<vmem>>, %arg4: memref<8x128xf32, #tpu.memory_space<vmem>>) attributes {dimension_semantics = [#tpu.dimension_semantics<parallel>], iteration_bounds = array<i64: 1>, scalar_prefetch = 0 : i64, scratch_operands = 0 : i64, tpu.core_type = #tpu.core_type<tc>, window_params = [{transform_indices = @transform_0, window_bounds = array<i64: 8, 128>}, {pipeline_mode = #tpu.pipeline_mode<synchronous>, transform_indices = @transform_1, window_bounds = array<i64: 1, 128>}, {pipeline_mode = #tpu.pipeline_mode<synchronous>, transform_indices = @transform_2, window_bounds = array<i64: 1, 128>}, {transform_indices = @transform_3, window_bounds = array<i64: 8, 128>}]} {
    %c0 = arith.constant 0 : index
    %c0_0 = arith.constant 0 : index
    %0 = vector.load %arg1[%c0, %c0_0] : memref<8x128xf32, #tpu.memory_space<vmem>>, vector<8x128xf32>
    %c0_1 = arith.constant 0 : index
    %c0_2 = arith.constant 0 : index
    %1 = vector.load %arg2[%c0_1, %c0_2] : memref<1x128xf32, #tpu.memory_space<vmem>>, vector<1x128xf32>
    %2 = vector.broadcast %1 : vector<1x128xf32> to vector<8x128xf32>
    %3 = arith.mulf %0, %2 : vector<8x128xf32>
    %c0_3 = arith.constant 0 : index
    %c0_4 = arith.constant 0 : index
    %4 = vector.load %arg3[%c0_3, %c0_4] : memref<1x128xf32, #tpu.memory_space<vmem>>, vector<1x128xf32>
    %5 = vector.broadcast %4 : vector<1x128xf32> to vector<8x128xf32>
    %6 = arith.addf %3, %5 : vector<8x128xf32>
    %7 = math.sin %6 : vector<8x128xf32>
    %c0_5 = arith.constant 0 : index
    %c0_6 = arith.constant 0 : index
    %8 = vector.load %arg4[%c0_5, %c0_6] : memref<8x128xf32, #tpu.memory_space<vmem>>, vector<8x128xf32>
    tpu.vector_store %arg4[%c0_5, %c0_6], %7 {strides = array<i32>} : memref<8x128xf32, #tpu.memory_space<vmem>>, vector<8x128xf32>,
    return
  }
  func.func @transform_0(%arg0: i32) -> (i32, i32) {
    %c0_i32 = arith.constant 0 : i32
    %c0_i32_0 = arith.constant 0 : i32
    return %arg0, %c0_i32 : i32, i32
  }
  func.func @transform_1(%arg0: i32) -> (i32, i32) {
    %c0_i32 = arith.constant 0 : i32
    %c0_i32_0 = arith.constant 0 : i32
    %c0_i32_1 = arith.constant 0 : i32
    return %c0_i32, %c0_i32_0 : i32, i32
  }
  func.func @transform_2(%arg0: i32) -> (i32, i32) {
    %c0_i32 = arith.constant 0 : i32
    %c0_i32_0 = arith.constant 0 : i32
    %c0_i32_1 = arith.constant 0 : i32
    return %c0_i32, %c0_i32_0 : i32, i32
  }
  func.func @transform_3(%arg0: i32) -> (i32, i32) {
    %c0_i32 = arith.constant 0 : i32
    %c0_i32_0 = arith.constant 0 : i32
    return %arg0, %c0_i32 : i32, i32
  }
}

</mosaic_0001>

<llo_original>
// kernel: tpu_custom_call.1
$region0: #{tpu_custom_call.1}
  #allocation0 [shape = 'u32[]', space=smem, size = 0x4, offset = 0x4, fixed_abs, tag = 'smem constant byte address 0x4 - core index']
  #allocation1 [shape = 'u32[144,128]{1,0:T(1,128)}', space=vmem, size = 0x12000, scoped, tag = 'internal scratch']
  %s0 = inlined_call_operand.hbm [shape: f32[8,128], index: 0, kind: input, shape index: {}]
  %s1 = inlined_call_operand.vmem [shape: f32[1,128], index: 1, kind: input, shape index: {}]
  %s2 = inlined_call_operand.vmem [shape: f32[1,128], index: 2, kind: input, shape index: {}]
  %s3 = inlined_call_operand.hbm [shape: f32[8,128], index: 3, kind: output, shape index: {}]
  %s4 = sld [smem:[#allocation0]]
  $region26: #{tpu_custom_call.1} parent=0
    _
  %s6 = ssub.s32 1, %s4
  %s7 = scalar_select 0, %s6, %s4
  $region1: #{tpu_custom_call.1} parent=0
    #allocation2 [shape = 'u8[4096]{0}', space=vmem, size = 0x1000, scoped, tag = 'input window, operand 0, single buffered']
    #allocation3 [shape = 's32[1]{0}', space=sflag, size = 0x4, scoped, tag = 'scoped memory for tpu_custom_call.1']
    #allocation4 [shape = 's32[1]{0}', space=sflag, size = 0x4, scoped, tag = 'scoped memory for tpu_custom_call.1']
    #allocation5 [shape = 'u8[4096]{0}', space=vmem, size = 0x1000, scoped, tag = 'output window, operand 0, single buffered']
    %8 = vsyncpa [#allocation3], 0
    %9 = vsyncpa [#allocation4], 0
    // Predicated region
    $region2: #{tpu_custom_call.1} parent=1 // pred_check
      _
    $region3: #{tpu_custom_call.1} parent=1 // pred_check_branch
      %11 = sbr.rel (0) target = $region5
    $region4: #{tpu_custom_call.1} parent=1 // pred_region
      %s13 = ssub.s32 128, 128
      %14 = vsyncadd [#allocation3], %s13
      %s16 = sshll.u32 [#allocation2], 4
      %s17 = int_to_ptr.vmem [resolvable:$true] %s16
      %19 = dma.hbm_to_vmem [thread:$0]  %s0, 128, %s17, [#allocation3]
    $region5: #{tpu_custom_call.1} parent=1 // pred_fallthru
      _
    // Predicated region
    $region6: #{tpu_custom_call.1} parent=1 // pred_check
      _
    $region7: #{tpu_custom_call.1} parent=1 // pred_check_branch
      %21 = sbr.rel (0) target = $region9
    $region8: #{tpu_custom_call.1} parent=1 // pred_region
      _
    $region9: #{tpu_custom_call.1} parent=1 // pred_fallthru
      _
    // Predicated region
    $region10: #{tpu_custom_call.1} parent=1 // pred_check
      _
    $region11: #{tpu_custom_call.1} parent=1 // pred_check_branch
      %23 = sbr.rel (0) target = $region13
    $region12: #{tpu_custom_call.1} parent=1 // pred_region
      _
    $region13: #{tpu_custom_call.1} parent=1 // pred_fallthru
      _
    // Predicated region
    $region14: #{tpu_custom_call.1} parent=1 // pred_check
      _
    $region15: #{tpu_custom_call.1} parent=1 // pred_check_branch
      %25 = sbr.rel (0) target = $region17
    $region16: #{tpu_custom_call.1} parent=1 // pred_region
      %26 = dma.done [#allocation3], 128
    $region17: #{tpu_custom_call.1} parent=1 // pred_fallthru
      _
    %v27 = vld [vmem:[#allocation2] sm:$0xff]
    %v28 = vld [vmem:[%s1] sm:$0x1]
    %v30 = vlaneseq
    %v31 = vshrl.u32 %v30, 7
    %v32 = vsub.s32 0, %v31
    %v33 = vrot.slane %v28, %v32
    %v35 = vmul.f32 %v27, %v33
    %v36 = vld [vmem:[%s2] sm:$0x1]
    %v38 = vlaneseq
    %v39 = vshrl.u32 %v38, 7
    %v40 = vsub.s32 0, %v39
    %v41 = vrot.slane %v36, %v40
    %v43 = vadd.f32 %v35, %v41
    %v44 = vand.u32 2147483647, %v43
    %vm45 = vcmp.le.f32.partialorder %v44, 0.7853982
    %vm46 = vcmp.lt.s32.totalorder %v43, 0
    %v47 = vand.u32 %v43, 2139095040
    %v48 = vshrl.u32 %v47, 23
    %v49 = vsub.s32 %v48, 127
    %v50 = vand.u32 2147483647, %v43
    %v51 = vand.u32 %v50, 8388607
    %v52 = vor.u32 %v51, 8388608
    %v53 = vsub.s32 0, %v52
    %v54 = vadd.s32 %v49, 1
    %vm55 = vcmp.gt.s32.totalorder %v54, 0
    %v56 = vsel %vm55, %v54, 0
    %v57 = vshrl.u32 %v56, 5
    %v58 = vand.u32 %v56, 31
    %v59 = vsub.s32 32, %v58
    %v60 = vshrl.u32 683565275, %v59
    %v61 = vshll.u32 683565275, %v58
    %v62 = vshrl.u32 2475754826, %v59
    %v63 = vor.u32 %v61, %v62
    %v64 = vshll.u32 2475754826, %v58
    %v65 = vshrl.u32 2131351028, %v59
    %v66 = vor.u32 %v64, %v65
    %v67 = vshll.u32 2131351028, %v58
    %v68 = vshrl.u32 2102212464, %v59
    %v69 = vor.u32 %v67, %v68
    %v70 = vshll.u32 2102212464, %v58
    %v71 = vshrl.u32 920167782, %v59
    %v72 = vor.u32 %v70, %v71
    %v73 = vshll.u32 920167782, %v58
    %v74 = vshrl.u32 1326507024, %v59
    %v75 = vor.u32 %v73, %v74
    %vm76 = vcmp.lt.s32.totalorder %v57, 1
    %vm77 = vcmp.lt.s32.totalorder %v57, 2
    %vm78 = vcmp.lt.s32.totalorder %v57, 3
    %vm79 = vcmp.lt.s32.totalorder %v57, 4
    %v80 = vsel %vm76, %v60, %v63
    %v81 = vsel %vm79, %v69, 2102212464
    %v82 = vsel %vm78, %v66, %v81
    %v83 = vsel %vm77, %v80, %v82
    %v84 = vsel %vm76, %v63, %v66
    %v85 = vsel %vm79, %v72, 920167782
    %v86 = vsel %vm78, %v69, %v85
    %v87 = vsel %vm77, %v84, %v86
    %v88 = vsel %vm76, %v66, %v69
    %v89 = vsel %vm79, %v75, 1326507024
    %v90 = vsel %vm78, %v72, %v89
    %v91 = vsel %vm77, %v88, %v90
    %v92 = vshll.u32 %v52, 8
    %v93 = vmul.u32.u64.compose %v92, %v91
    %v94 = vextract.low.u32 %v93
    %v95 = vextract.high.u32 %v93
    %v96 = vmul.u32.u64.compose %v92, %v87
    %v97 = vextract.low.u32 %v96
    %v98 = vextract.high.u32 %v96
    %v99 = vmul.u32 %v92, %v83
    %v100 = vadd.s32 %v95, %v97
    %vm101 = vc.u32 %v95, %v97
    %v102 = vadd.s32 %v98, 1
    %v103 = vsel %vm101, %v102, %v98
    %v104 = vadd.s32 %v99, %v103
    %v105 = vadd.s32 %v104, 536870912
    %v106 = vshrl.u32 %v105, 30
    %v107 = vshll.u32 %v106, 30
    %v108 = vsub.s32 %v104, %v107
    %vm109 = vcmp.lt.s32.totalorder %v108, 0
    %v110 = vsub.s32 0, %v108
    %v111 = vsel %vm109, %v110, %v108
    %v112 = vclz %v111
    %v113 = vsub.s32 %v112, 2
    %vm114 = vcmp.gt.s32.totalorder 0, %v113
    %v115 = vsel %vm114, 0, %v113
    %v116 = vsub.s32 32, %v115
    %v117 = vshll.u32 %v108, %v115
    %v118 = vshrl.u32 %v100, %v116
    %v119 = vor.u32 %v117, %v118
    %v120 = vsub.s32 4294967266, %v115
    %v121 = vadd.s32 %v120, 127
    %v122 = vshll.u32 %v121, 23
    %v123 = vor.u32 4788187, %v122
    %v124 = vand.u32 2147483647, %v123
    %v126 = vcvt.s32.f32 %v119
    %v127 = vmul.f32 %v126, %v124
    %v128 = vxor.u32 %v127, 2147483648
    %v129 = vsel %vm46, %v128, %v127
    %v130 = vsub.s32 4, %v106
    %v131 = vsel %vm46, %v130, %v106
    %v132 = vsel %vm45, %v43, %v129
    %v133 = vsel %vm45, 0, %v131
    %v134 = vcosq.f32.pop %v132
    %v135 = vsinq.f32.pop %v132
    %vm136 = vweird.f32 %v43
    %v137 = vadd.s32 %v133, 3
    %v138 = vand.u32 %v137, 3
    %vm139 = vcmp.lt.s32.totalorder %v138, 2
    %vm140 = vcmp.eq.s32.totalorder %v138, 0
    %v141 = vxor.u32 %v135, 2147483648
    %v142 = vsel %vm140, %v134, %v141
    %vm143 = vcmp.eq.s32.totalorder %v138, 2
    %v144 = vxor.u32 %v134, 2147483648
    %v145 = vsel %vm143, %v144, %v135
    %v146 = vsel %vm139, %v142, %v145
    %v147 = vsel %vm136, nan, %v146
    %148 = vst [vmem:[#allocation5] sm:$0xff] %v147
    // Predicated region
    $region18: #{tpu_custom_call.1} parent=1 // pred_check
      _
    $region19: #{tpu_custom_call.1} parent=1 // pred_check_branch
      %150 = sbr.rel (0) target = $region21
    $region20: #{tpu_custom_call.1} parent=1 // pred_region
      %s152 = ssub.s32 128, 128
      %153 = vsyncadd [#allocation4], %s152
      %s155 = sshll.u32 [#allocation5], 4
      %s156 = int_to_ptr.vmem [resolvable:$true] %s155
      %158 = dma.vmem_to_hbm [thread:$0]  %s156, 128, %s3, [#allocation4]
    $region21: #{tpu_custom_call.1} parent=1 // pred_fallthru
      _
    // Predicated region
    $region22: #{tpu_custom_call.1} parent=1 // pred_check
      _
    $region23: #{tpu_custom_call.1} parent=1 // pred_check_branch
      %160 = sbr.rel (0) target = $region25
    $region24: #{tpu_custom_call.1} parent=1 // pred_region
      %161 = dma.done [#allocation4], 128
    $region25: #{tpu_custom_call.1} parent=1 // pred_fallthru
      _
    %162 = vsyncpa [#allocation3], 1
    %163 = vsyncpa [#allocation4], 1

</llo_original>
